<compile_context>
chip_gen: v5e
topology: v5e:2x2
jax: 0.10.0
libtpu: 0.0.40
codegen_flags: <defaults>
</compile_context>

<pallas_src>
import functools

import numpy as np
import jax
import jax.numpy as jnp
from jax import lax
from jax.experimental import pallas as pl
from jax.experimental.pallas import tpu as pltpu

TOP_K = 5
_LANE = 128


def _round_up(x, m):
    return ((x + m - 1) // m) * m


@functools.lru_cache(maxsize=None)
def _dft_matrices(L: int):
    """Fused, lane-padded rfft / irfft basis matrices (host-side, cached).

    fwd : (L, 2*Fpad)  so that  x @ fwd == [Re(rfft x) | Im(rfft x)]  (zero-padded)
    inv : (2*Fpad, L)  so that  [Re | Im] @ inv == irfft(xf, n=L)
    The cos/sin argument is reduced exactly with integer (n*f) mod L and the
    tables are built in float64 before the f32 cast, so they stay accurate for
    large L.
    """
    Fn = L // 2 + 1
    Fpad = _round_up(Fn, _LANE)

    n = np.arange(L, dtype=np.int64)
    f = np.arange(Fn, dtype=np.int64)
    k = (n[:, None] * f[None, :]) % L                      # exact argument reduction
    ang = 2.0 * np.pi * k.astype(np.float64) / L           # (L, Fn)
    cf = np.cos(ang)                                       # Re{exp(-i*ang)}
    sf = -np.sin(ang)                                      # Im{exp(-i*ang)}

    # Hermitian-symmetry weights for the inverse transform.
    c = np.full((Fn,), 2.0, dtype=np.float64)
    c[0] = 1.0
    if L % 2 == 0:
        c[-1] = 1.0
    ci = (c[:, None] * cf.T) / L                           # (Fn, L)
    si = (c[:, None] * sf.T) / L                           # (Fn, L)

    fwd = np.zeros((L, 2 * Fpad), dtype=np.float32)
    fwd[:, :Fn] = cf
    fwd[:, Fpad:Fpad + Fn] = sf
    inv = np.zeros((2 * Fpad, L), dtype=np.float32)
    inv[:Fn, :] = ci
    inv[Fpad:Fpad + Fn, :] = si
    # TODO(synk): optionally cast fwd/inv (and x) to bf16 for ~2x MXU throughput
    # when bit-level parity with torch.fft.rfft in f32 is not required.
    return jnp.asarray(fwd), jnp.asarray(inv)


def _decomp_kernel(x_ref, fwd_ref, inv_ref, season_ref, trend_ref, *,
                   Fn: int, Fpad: int, top_k: int):
    x = x_ref[...]                                                      # (TR, L) f32

    # Forward rfft as ONE fused MXU matmul: xf = [Re | Im], lane-padded to 2*Fpad.
    xf = jnp.dot(x, fwd_ref[...], preferred_element_type=jnp.float32)   # (TR, 2*Fpad)

    # Squared magnitude (sqrt is monotone, so top-k selection is unchanged).
    xsq = xf * xf
    freq = xsq[:, :Fpad] + xsq[:, Fpad:]                                # (TR, Fpad)

    iota = lax.broadcasted_iota(jnp.int32, freq.shape, 1)
    work = jnp.where(iota == 0, 0.0, freq)          # freq[:, :, 0] = 0 (DC bin)
    work = jnp.where(iota < Fn, work, -jnp.inf)     # lane padding never selected

    # Top-k mask: a single cross-lane max (XLU) per round; exact comparisons.
    mask = jnp.zeros(freq.shape, jnp.bool_)
    for _ in range(top_k):
        m = jnp.max(work, axis=-1, keepdims=True)
        sel = work == m
        mask = mask | sel
        work = jnp.where(sel, -jnp.inf, work)

    # Zero all non-top-k coefficients (Re and Im masked identically).
    xf = jnp.where(jnp.concatenate([mask, mask], axis=-1), xf, 0.0)

    # Inverse rfft as ONE fused MXU matmul, residual on the VPU.
    season = jnp.dot(xf, inv_ref[...], preferred_element_type=jnp.float32)
    season_ref[...] = season.astype(season_ref.dtype)
    trend_ref[...] = (x - season).astype(trend_ref.dtype)


def dft_series_decomp(x: jax.Array, top_k: int = TOP_K):
    """x: (B, C, L) -> (x_season, x_trend), each (B, C, L) float32."""
    B, C, L = x.shape
    R = B * C
    Fn = L // 2 + 1
    Fpad = _round_up(Fn, _LANE)
    fwd, inv = _dft_matrices(L)

    # Row-tile size: multiple of 8 sublanes, sized so the double-buffered
    # input/output tiles plus the (TR, 2*Fpad) intermediates fit comfortably in
    # the scoped VMEM budget on v5e / v6e / v7x.
    TR = min(256, _round_up(R, 8))
    Rpad = _round_up(R, TR)

    # TODO(synk): for very small L with very large R, a transposed (L, R) layout
    # with R on the 128-lane axis would make season/trend stores fully lane-dense.
    x2 = x.reshape(R, L).astype(jnp.float32)
    if Rpad != R:
        x2 = jnp.pad(x2, ((0, Rpad - R), (0, 0)))

    cost = pl.CostEstimate(
        flops=8 * Rpad * L * Fpad,                       # two fused matmuls
        transcendentals=0,
        bytes_accessed=3 * Rpad * L * 4 + 2 * (L * 2 * Fpad) * 4,
    )

    kernel = functools.partial(_decomp_kernel, Fn=Fn, Fpad=Fpad, top_k=top_k)
    season2, trend2 = pl.pallas_call(
        kernel,
        out_shape=(jax.ShapeDtypeStruct((Rpad, L), jnp.float32),
                   jax.ShapeDtypeStruct((Rpad, L), jnp.float32)),
        grid_spec=pltpu.PrefetchScalarGridSpec(
            num_scalar_prefetch=0,
            grid=(Rpad // TR,),
            in_specs=[
                pl.BlockSpec((TR, L), lambda i: (i, 0)),        # row tile of x
                pl.BlockSpec((L, 2 * Fpad), lambda i: (0, 0)),  # VMEM-resident basis
                pl.BlockSpec((2 * Fpad, L), lambda i: (0, 0)),  # VMEM-resident basis
            ],
            out_specs=[
                pl.BlockSpec((TR, L), lambda i: (i, 0)),
                pl.BlockSpec((TR, L), lambda i: (i, 0)),
            ],
        ),
        compiler_params=pltpu.CompilerParams(
            dimension_semantics=("parallel",),          # row tiles split across TCs
            vmem_limit_bytes=48 * 1024 * 1024,
        ),
        cost_estimate=cost,
    )(x2, fwd, inv)

    season = season2[:R].reshape(B, C, L)
    trend = trend2[:R].reshape(B, C, L)
    return season, trend


def _reference(x, top_k=TOP_K):
    """Pure-JAX reference mirroring the PyTorch module."""
    xf = jnp.fft.rfft(x, axis=-1)
    freq = jnp.abs(xf)
    freq = freq.at[..., 0].set(0.0)
    _, top_idx = lax.top_k(freq, top_k)
    Fn = freq.shape[-1]
    mask = jnp.any(top_idx[..., :, None] == jnp.arange(Fn), axis=-2)
    xf = jnp.where(mask, xf, 0)
    season = jnp.fft.irfft(xf, n=x.shape[-1], axis=-1)
    return season, x - season


if __name__ == "__main__":
    key = jax.random.PRNGKey(0)

    # Small shape consistent with the module's [B, C, L] input.
    B, C, L = 2, 4, 16
    x = jax.random.normal(key, (B, C, L), dtype=jnp.float32)
    season, trend = dft_series_decomp(x)
    jax.block_until_ready((season, trend))

    ref_s, ref_t = _reference(x)
    assert jnp.allclose(season, ref_s, atol=1e-4), "season mismatch"
    assert jnp.allclose(trend, ref_t, atol=1e-4), "trend mismatch"
    assert jnp.allclose(season + trend, x, atol=1e-5), "decomposition not exact"

    # Second case exercising the multi-tile grid and the row-padding path.
    x2 = jax.random.normal(jax.random.PRNGKey(0), (5, 64, 24), dtype=jnp.float32)
    s2, t2 = dft_series_decomp(x2)
    jax.block_until_ready((s2, t2))
    r2s, r2t = _reference(x2)
    assert jnp.allclose(s2, r2s, atol=1e-4), "season mismatch (case 2)"
    assert jnp.allclose(t2, r2t, atol=1e-4), "trend mismatch (case 2)"

    print("KERNEL_OK")
</pallas_src>

<mosaic_0001>
module attributes {stable_mosaic.version = 11 : i64} {
  func.func @_decomp_kernel(%arg0: i32, %arg1: memref<8x16xf32, #tpu.memory_space<vmem>>, %arg2: memref<16x256xf32, #tpu.memory_space<vmem>>, %arg3: memref<256x16xf32, #tpu.memory_space<vmem>>, %arg4: memref<8x16xf32, #tpu.memory_space<vmem>>, %arg5: memref<8x16xf32, #tpu.memory_space<vmem>>) attributes {dimension_semantics = [#tpu.dimension_semantics<parallel>], iteration_bounds = array<i64: 1>, scalar_prefetch = 0 : i64, scratch_operands = 0 : i64, tpu.core_type = #tpu.core_type<tc>, window_params = [{transform_indices = @transform_0, window_bounds = array<i64: 8, 16>}, {pipeline_mode = #tpu.pipeline_mode<synchronous>, transform_indices = @transform_1, window_bounds = array<i64: 16, 256>}, {pipeline_mode = #tpu.pipeline_mode<synchronous>, transform_indices = @transform_2, window_bounds = array<i64: 256, 16>}, {transform_indices = @transform_3, window_bounds = array<i64: 8, 16>}, {transform_indices = @transform_4, window_bounds = array<i64: 8, 16>}]} {
    %c0 = arith.constant 0 : index
    %c0_0 = arith.constant 0 : index
    %0 = vector.load %arg1[%c0, %c0_0] : memref<8x16xf32, #tpu.memory_space<vmem>>, vector<8x16xf32>
    %c0_1 = arith.constant 0 : index
    %c0_2 = arith.constant 0 : index
    %1 = vector.load %arg2[%c0_1, %c0_2] : memref<16x256xf32, #tpu.memory_space<vmem>>, vector<16x256xf32>
    %cst = arith.constant dense<0.000000e+00> : vector<8x256xf32>
    %2 = tpu.matmul %0, %1, %cst {dimension_numbers = #tpu.dot_dimension_numbers<[1], [0], [0], [1], [0, 0, 1, 1], [], []>} : vector<8x16xf32>, vector<16x256xf32>, vector<8x256xf32> -> vector<8x256xf32>
    %3 = arith.mulf %2, %2 : vector<8x256xf32>
    %4 = vector.extract_strided_slice %3 {offsets = [0, 0], sizes = [8, 128], strides = [1, 1]} : vector<8x256xf32> to vector<8x128xf32>
    %5 = vector.extract_strided_slice %3 {offsets = [0, 128], sizes = [8, 128], strides = [1, 1]} : vector<8x256xf32> to vector<8x128xf32>
    %6 = arith.addf %4, %5 : vector<8x128xf32>
    %7 = tpu.iota {dimensions = array<i32: 1>} : vector<8x128xi32>
    %c0_i32 = arith.constant 0 : i32
    %8 = vector.broadcast %c0_i32 : i32 to vector<8x128xi32>
    %9 = arith.cmpi eq, %7, %8 : vector<8x128xi32>
    %cst_3 = arith.constant 0.000000e+00 : f32
    %10 = vector.broadcast %cst_3 : f32 to vector<8x128xf32>
    %11 = arith.select %9, %10, %6 : vector<8x128xi1>, vector<8x128xf32>
    %c9_i32 = arith.constant 9 : i32
    %12 = vector.broadcast %c9_i32 : i32 to vector<8x128xi32>
    %13 = arith.cmpi slt, %7, %12 : vector<8x128xi32>
    %cst_4 = arith.constant 0xFF800000 : f32
    %14 = vector.broadcast %cst_4 : f32 to vector<8x128xf32>
    %15 = arith.select %13, %11, %14 : vector<8x128xi1>, vector<8x128xf32>
    %false = arith.constant false
    %16 = vector.broadcast %false : i1 to vector<8x128xi1>
    %cst_5 = arith.constant dense<0xFF800000> : vector<8xf32>
    %17 = vector.multi_reduction <maximumf>, %15, %cst_5 [1] : vector<8x128xf32> to vector<8xf32>
    %18 = vector.shape_cast %17 : vector<8xf32> to vector<8x1xf32>
    %19 = vector.broadcast %18 : vector<8x1xf32> to vector<8x128xf32>
    %20 = arith.cmpf oeq, %15, %19 : vector<8x128xf32>
    %21 = arith.ori %16, %20 : vector<8x128xi1>
    %cst_6 = arith.constant 0xFF800000 : f32
    %22 = vector.broadcast %cst_6 : f32 to vector<8x128xf32>
    %23 = arith.select %20, %22, %15 : vector<8x128xi1>, vector<8x128xf32>
    %cst_7 = arith.constant dense<0xFF800000> : vector<8xf32>
    %24 = vector.multi_reduction <maximumf>, %23, %cst_7 [1] : vector<8x128xf32> to vector<8xf32>
    %25 = vector.shape_cast %24 : vector<8xf32> to vector<8x1xf32>
    %26 = vector.broadcast %25 : vector<8x1xf32> to vector<8x128xf32>
    %27 = arith.cmpf oeq, %23, %26 : vector<8x128xf32>
    %28 = arith.ori %21, %27 : vector<8x128xi1>
    %cst_8 = arith.constant 0xFF800000 : f32
    %29 = vector.broadcast %cst_8 : f32 to vector<8x128xf32>
    %30 = arith.select %27, %29, %23 : vector<8x128xi1>, vector<8x128xf32>
    %cst_9 = arith.constant dense<0xFF800000> : vector<8xf32>
    %31 = vector.multi_reduction <maximumf>, %30, %cst_9 [1] : vector<8x128xf32> to vector<8xf32>
    %32 = vector.shape_cast %31 : vector<8xf32> to vector<8x1xf32>
    %33 = vector.broadcast %32 : vector<8x1xf32> to vector<8x128xf32>
    %34 = arith.cmpf oeq, %30, %33 : vector<8x128xf32>
    %35 = arith.ori %28, %34 : vector<8x128xi1>
    %cst_10 = arith.constant 0xFF800000 : f32
    %36 = vector.broadcast %cst_10 : f32 to vector<8x128xf32>
    %37 = arith.select %34, %36, %30 : vector<8x128xi1>, vector<8x128xf32>
    %cst_11 = arith.constant dense<0xFF800000> : vector<8xf32>
    %38 = vector.multi_reduction <maximumf>, %37, %cst_11 [1] : vector<8x128xf32> to vector<8xf32>
    %39 = vector.shape_cast %38 : vector<8xf32> to vector<8x1xf32>
    %40 = vector.broadcast %39 : vector<8x1xf32> to vector<8x128xf32>
    %41 = arith.cmpf oeq, %37, %40 : vector<8x128xf32>
    %42 = arith.ori %35, %41 : vector<8x128xi1>
    %cst_12 = arith.constant 0xFF800000 : f32
    %43 = vector.broadcast %cst_12 : f32 to vector<8x128xf32>
    %44 = arith.select %41, %43, %37 : vector<8x128xi1>, vector<8x128xf32>
    %cst_13 = arith.constant dense<0xFF800000> : vector<8xf32>
    %45 = vector.multi_reduction <maximumf>, %44, %cst_13 [1] : vector<8x128xf32> to vector<8xf32>
    %46 = vector.shape_cast %45 : vector<8xf32> to vector<8x1xf32>
    %47 = vector.broadcast %46 : vector<8x1xf32> to vector<8x128xf32>
    %48 = arith.cmpf oeq, %44, %47 : vector<8x128xf32>
    %49 = arith.ori %42, %48 : vector<8x128xi1>
    %50 = tpu.concatenate %49, %49 in 1 : vector<8x128xi1>, vector<8x128xi1> -> vector<8x256xi1>
    %cst_14 = arith.constant 0.000000e+00 : f32
    %51 = vector.broadcast %cst_14 : f32 to vector<8x256xf32>
    %52 = arith.select %50, %2, %51 : vector<8x256xi1>, vector<8x256xf32>
    %c0_15 = arith.constant 0 : index
    %c0_16 = arith.constant 0 : index
    %53 = vector.load %arg3[%c0_15, %c0_16] : memref<256x16xf32, #tpu.memory_space<vmem>>, vector<256x16xf32>
    %cst_17 = arith.constant dense<0.000000e+00> : vector<8x16xf32>
    %54 = tpu.matmul %52, %53, %cst_17 {dimension_numbers = #tpu.dot_dimension_numbers<[1], [0], [0], [1], [0, 0, 1, 1], [], []>} : vector<8x256xf32>, vector<256x16xf32>, vector<8x16xf32> -> vector<8x16xf32>
    %c0_18 = arith.constant 0 : index
    %c0_19 = arith.constant 0 : index
    %55 = vector.load %arg4[%c0_18, %c0_19] : memref<8x16xf32, #tpu.memory_space<vmem>>, vector<8x16xf32>
    tpu.vector_store %arg4[%c0_18, %c0_19], %54 {strides = array<i32>} : memref<8x16xf32, #tpu.memory_space<vmem>>, vector<8x16xf32>,
    %56 = arith.subf %0, %54 : vector<8x16xf32>
    %c0_20 = arith.constant 0 : index
    %c0_21 = arith.constant 0 : index
    %57 = vector.load %arg5[%c0_20, %c0_21] : memref<8x16xf32, #tpu.memory_space<vmem>>, vector<8x16xf32>
    tpu.vector_store %arg5[%c0_20, %c0_21], %56 {strides = array<i32>} : memref<8x16xf32, #tpu.memory_space<vmem>>, vector<8x16xf32>,
    return
  }
  func.func @transform_0(%arg0: i32) -> (i32, i32) {
    %c0_i32 = arith.constant 0 : i32
    %c0_i32_0 = arith.constant 0 : i32
    return %arg0, %c0_i32 : i32, i32
  }
  func.func @transform_1(%arg0: i32) -> (i32, i32) {
    %c0_i32 = arith.constant 0 : i32
    %c0_i32_0 = arith.constant 0 : i32
    %c0_i32_1 = arith.constant 0 : i32
    return %c0_i32, %c0_i32_0 : i32, i32
  }
  func.func @transform_2(%arg0: i32) -> (i32, i32) {
    %c0_i32 = arith.constant 0 : i32
    %c0_i32_0 = arith.constant 0 : i32
    %c0_i32_1 = arith.constant 0 : i32
    return %c0_i32, %c0_i32_0 : i32, i32
  }
  func.func @transform_3(%arg0: i32) -> (i32, i32) {
    %c0_i32 = arith.constant 0 : i32
    %c0_i32_0 = arith.constant 0 : i32
    return %arg0, %c0_i32 : i32, i32
  }
  func.func @transform_4(%arg0: i32) -> (i32, i32) {
    %c0_i32 = arith.constant 0 : i32
    %c0_i32_0 = arith.constant 0 : i32
    return %arg0, %c0_i32 : i32, i32
  }
}

</mosaic_0001>

<llo_original>
// kernel: tpu_custom_call.1
$region0: #{tpu_custom_call.1}
  #allocation0 [shape = 'u32[]', space=smem, size = 0x4, offset = 0x4, fixed_abs, tag = 'smem constant byte address 0x4 - core index']
  #allocation1 [shape = 'u32[72,128]{1,0:T(1,128)}', space=vmem, size = 0x9000, scoped, tag = 'internal scratch']
  %s0 = inlined_call_operand.vmem [shape: f32[8,16], index: 0, kind: input, shape index: {}]
  %s1 = inlined_call_operand.vmem [shape: f32[16,256], index: 1, kind: input, shape index: {}]
  %s2 = inlined_call_operand.vmem [shape: f32[256,16], index: 2, kind: input, shape index: {}]
  %s3 = inlined_call_operand.hbm [shape: f32[8,16], index: 3, kind: output, shape index: {0}]
  %s4 = inlined_call_operand.hbm [shape: f32[8,16], index: 4, kind: output, shape index: {1}]
  %5 = xla_tuple %s3, %s4
  %s6 = sld [smem:[#allocation0]]
  $region30: #{tpu_custom_call.1} parent=0
    _
  %s8 = ssub.s32 1, %s6
  %s9 = scalar_select 0, %s8, %s6
  $region1: #{tpu_custom_call.1} parent=0
    #allocation2 [shape = 'u8[4096]{0}', space=vmem, size = 0x1000, scoped, tag = 'output window, operand 0, single buffered']
    #allocation3 [shape = 's32[1]{0}', space=sflag, size = 0x4, scoped, tag = 'scoped memory for tpu_custom_call.1']
    #allocation4 [shape = 'u8[4096]{0}', space=vmem, size = 0x1000, scoped, tag = 'output window, operand 1, single buffered']
    #allocation5 [shape = 's32[1]{0}', space=sflag, size = 0x4, scoped, tag = 'scoped memory for tpu_custom_call.1']
    %10 = vsyncpa [#allocation3], 0
    %11 = vsyncpa [#allocation5], 0
    // Predicated region
    $region2: #{tpu_custom_call.1} parent=1 // pred_check
      _
    $region3: #{tpu_custom_call.1} parent=1 // pred_check_branch
      %13 = sbr.rel (0) target = $region5
    $region4: #{tpu_custom_call.1} parent=1 // pred_region
      _
    $region5: #{tpu_custom_call.1} parent=1 // pred_fallthru
      _
    // Predicated region
    $region6: #{tpu_custom_call.1} parent=1 // pred_check
      _
    $region7: #{tpu_custom_call.1} parent=1 // pred_check_branch
      %15 = sbr.rel (0) target = $region9
    $region8: #{tpu_custom_call.1} parent=1 // pred_region
      _
    $region9: #{tpu_custom_call.1} parent=1 // pred_fallthru
      _
    // Predicated region
    $region10: #{tpu_custom_call.1} parent=1 // pred_check
      _
    $region11: #{tpu_custom_call.1} parent=1 // pred_check_branch
      %17 = sbr.rel (0) target = $region13
    $region12: #{tpu_custom_call.1} parent=1 // pred_region
      _
    $region13: #{tpu_custom_call.1} parent=1 // pred_fallthru
      _
    %v18 = vld [vmem:[%s0] sm:$0xff]
    %v19 = vld [vmem:[%s1] sm:$0xff]
    %v20 = vld [vmem:[%s1 + $0x8] sm:$0xff]
    %v21 = vld [vmem:[%s1 + $0x10] sm:$0xff]
    %v22 = vld [vmem:[%s1 + $0x18] sm:$0xff]
    %vm23 = vcmask 130048
    %v25 = vsel %vm23, %v18, 0
    %27 = vmatpush.msra.mxu0 0.0
    %28 = vmatpush.msra.mxu0 0.0
    %29 = vmatpush.msra.mxu0 0.0
    %30 = vmatpush.msra.mxu0 0.0
    %31 = vmatpush.msra.mxu0 0.0
    %32 = vmatpush.msra.mxu0 0.0
    %33 = vmatpush.msra.mxu0 0.0
    %34 = vmatpush.msra.mxu0 0.0
    %35 = vmatpush.msra.mxu0 0.0
    %36 = vmatpush.msra.mxu0 0.0
    %37 = vmatpush.msra.mxu0 0.0
    %38 = vmatpush.msra.mxu0 0.0
    %39 = vmatpush.msra.mxu0 0.0
    %40 = vmatpush.msra.mxu0 0.0
    %41 = vmatpush.msra.mxu0 %v21
    %42 = vmatpush.msra.mxu0 %v19
    %43 = vmatmul.f32.gmra.mxu0 %v25
    %v44 = vpop.f32.mrf.mxu0
    %v45 = vadd.f32 0.0, %v44
    %46 = vdwg.mxu0
    %47 = vmatpush.msra.mxu0 0.0
    %48 = vmatpush.msra.mxu0 0.0
    %49 = vmatpush.msra.mxu0 0.0
    %50 = vmatpush.msra.mxu0 0.0
    %51 = vmatpush.msra.mxu0 0.0
    %52 = vmatpush.msra.mxu0 0.0
    %53 = vmatpush.msra.mxu0 0.0
    %54 = vmatpush.msra.mxu0 0.0
    %55 = vmatpush.msra.mxu0 0.0
    %56 = vmatpush.msra.mxu0 0.0
    %57 = vmatpush.msra.mxu0 0.0
    %58 = vmatpush.msra.mxu0 0.0
    %59 = vmatpush.msra.mxu0 0.0
    %60 = vmatpush.msra.mxu0 0.0
    %61 = vmatpush.msra.mxu0 %v22
    %62 = vmatpush.msra.mxu0 %v20
    %63 = vmatmul.f32.gmra.mxu0 %v25
    %v64 = vpop.f32.mrf.mxu0
    %v65 = vadd.f32 0.0, %v64
    %66 = vdwg.mxu0
    %v67 = vmul.f32 %v45, %v45
    %v68 = vmul.f32 %v65, %v65
    %v69 = vadd.f32 %v67, %v68
    %v70 = vlaneseq
    %v71 = vand.u32 %v70, 127
    %vm72 = vcmp.eq.s32.totalorder %v71, 0
    %v73 = vsel %vm72, 0.0, %v69
    %vm74 = vcmp.lt.s32.totalorder %v71, 9
    %v75 = vsel %vm74, %v73, -inf
    %76 = vmax.xlane.f32.xlu0 %v75
    %v77 = vpop.xlane.xlu0 %76
    %vm78 = vcmp.eq.f32.partialorder %v75, %v77
    %v79 = vsel %vm78, -inf, %v75
    %80 = vmax.xlane.f32.xlu0 %v79
    %v81 = vpop.xlane.xlu0 %80
    %vm82 = vcmp.eq.f32.partialorder %v79, %v81
    %vm83 = vmor %vm78, %vm82
    %v84 = vsel %vm82, -inf, %v79
    %85 = vmax.xlane.f32.xlu0 %v84
    %v86 = vpop.xlane.xlu0 %85
    %vm87 = vcmp.eq.f32.partialorder %v84, %v86
    %vm88 = vmor %vm83, %vm87
    %v89 = vsel %vm87, -inf, %v84
    %90 = vmax.xlane.f32.xlu0 %v89
    %v91 = vpop.xlane.xlu0 %90
    %vm92 = vcmp.eq.f32.partialorder %v89, %v91
    %vm93 = vmor %vm88, %vm92
    %v94 = vsel %vm92, -inf, %v89
    %95 = vmax.xlane.f32.xlu0 %v94
    %v96 = vpop.xlane.xlu0 %95
    %vm97 = vcmp.eq.f32.partialorder %v94, %v96
    %vm98 = vmor %vm93, %vm97
    %v99 = vsel %vm98, %v45, 0.0
    %v100 = vsel %vm98, %v65, 0.0
    %v101 = vld [vmem:[%s2] sm:$0xff]
    %v102 = vld [vmem:[%s2 + $0x8] sm:$0xff]
    %v103 = vld [vmem:[%s2 + $0x10] sm:$0xff]
    %v104 = vld [vmem:[%s2 + $0x18] sm:$0xff]
    %v105 = vld [vmem:[%s2 + $0x20] sm:$0xff]
    %v106 = vld [vmem:[%s2 + $0x28] sm:$0xff]
    %v107 = vld [vmem:[%s2 + $0x30] sm:$0xff]
    %v108 = vld [vmem:[%s2 + $0x38] sm:$0xff]
    %v109 = vld [vmem:[%s2 + $0x40] sm:$0xff]
    %v110 = vld [vmem:[%s2 + $0x48] sm:$0xff]
    %v111 = vld [vmem:[%s2 + $0x50] sm:$0xff]
    %v112 = vld [vmem:[%s2 + $0x58] sm:$0xff]
    %v113 = vld [vmem:[%s2 + $0x60] sm:$0xff]
    %v114 = vld [vmem:[%s2 + $0x68] sm:$0xff]
    %v115 = vld [vmem:[%s2 + $0x70] sm:$0xff]
    %v116 = vld [vmem:[%s2 + $0x78] sm:$0xff]
    %v117 = vld [vmem:[%s2 + $0x80] sm:$0xff]
    %v118 = vld [vmem:[%s2 + $0x88] sm:$0xff]
    %v119 = vld [vmem:[%s2 + $0x90] sm:$0xff]
    %v120 = vld [vmem:[%s2 + $0x98] sm:$0xff]
    %v121 = vld [vmem:[%s2 + $0xa0] sm:$0xff]
    %v122 = vld [vmem:[%s2 + $0xa8] sm:$0xff]
    %v123 = vld [vmem:[%s2 + $0xb0] sm:$0xff]
    %v124 = vld [vmem:[%s2 + $0xb8] sm:$0xff]
    %v125 = vld [vmem:[%s2 + $0xc0] sm:$0xff]
    %v126 = vld [vmem:[%s2 + $0xc8] sm:$0xff]
    %v127 = vld [vmem:[%s2 + $0xd0] sm:$0xff]
    %v128 = vld [vmem:[%s2 + $0xd8] sm:$0xff]
    %v129 = vld [vmem:[%s2 + $0xe0] sm:$0xff]
    %v130 = vld [vmem:[%s2 + $0xe8] sm:$0xff]
    %v131 = vld [vmem:[%s2 + $0xf0] sm:$0xff]
    %v132 = vld [vmem:[%s2 + $0xf8] sm:$0xff]
    %133 = vmatpush.msra.mxu0 %v116
    %134 = vmatpush.msra.mxu0 %v115
    %135 = vmatpush.msra.mxu0 %v114
    %136 = vmatpush.msra.mxu0 %v113
    %137 = vmatpush.msra.mxu0 %v112
    %138 = vmatpush.msra.mxu0 %v111
    %139 = vmatpush.msra.mxu0 %v110
    %140 = vmatpush.msra.mxu0 %v109
    %141 = vmatpush.msra.mxu0 %v108
    %142 = vmatpush.msra.mxu0 %v107
    %143 = vmatpush.msra.mxu0 %v106
    %144 = vmatpush.msra.mxu0 %v105
    %145 = vmatpush.msra.mxu0 %v104
    %146 = vmatpush.msra.mxu0 %v103
    %147 = vmatpush.msra.mxu0 %v102
    %148 = vmatpush.msra.mxu0 %v101
    %149 = vmatmul.f32.gmra.mxu0 %v99
    %v150 = vpop.f32.mrf.mxu0
    %v151 = vadd.f32 0.0, %v150
    %152 = vdwg.mxu0
    %153 = vmatpush.msra.mxu0 %v132
    %154 = vmatpush.msra.mxu0 %v131
    %155 = vmatpush.msra.mxu0 %v130
    %156 = vmatpush.msra.mxu0 %v129
    %157 = vmatpush.msra.mxu0 %v128
    %158 = vmatpush.msra.mxu0 %v127
    %159 = vmatpush.msra.mxu0 %v126
    %160 = vmatpush.msra.mxu0 %v125
    %161 = vmatpush.msra.mxu0 %v124
    %162 = vmatpush.msra.mxu0 %v123
    %163 = vmatpush.msra.mxu0 %v122
    %164 = vmatpush.msra.mxu0 %v121
    %165 = vmatpush.msra.mxu0 %v120
    %166 = vmatpush.msra.mxu0 %v119
    %167 = vmatpush.msra.mxu0 %v118
    %168 = vmatpush.msra.mxu0 %v117
    %169 = vmatmul.f32.gmra.mxu0 %v100
    %v170 = vpop.f32.mrf.mxu0
    %v171 = vadd.f32 %v151, %v170
    %172 = vdwg.mxu0
    %173 = vst.msk [vmem:[#allocation2] sm:$0xff] %vm23, %v171
    %v174 = vsub.f32 %v18, %v171
    %175 = vst.msk [vmem:[#allocation4] sm:$0xff] %vm23, %v174
    // Predicated region
    $region14: #{tpu_custom_call.1} parent=1 // pred_check
      _
    $region15: #{tpu_custom_call.1} parent=1 // pred_check_branch
      %177 = sbr.rel (0) target = $region17
    $region16: #{tpu_custom_call.1} parent=1 // pred_region
      %179 = vsyncadd [#allocation3], 0
      %s181 = sshll.u32 [#allocation2], 4
      %s182 = int_to_ptr.vmem [resolvable:$true] %s181
      %s183 = sshll.u32 %s3, 4
      %s184 = int_to_ptr.hbm [resolvable:$true] %s183
      %186 = dma.vmem_to_hbm [thread:$0]  %s182, 128, %s184, [#allocation3]
    $region17: #{tpu_custom_call.1} parent=1 // pred_fallthru
      _
    // Predicated region
    $region18: #{tpu_custom_call.1} parent=1 // pred_check
      _
    $region19: #{tpu_custom_call.1} parent=1 // pred_check_branch
      %188 = sbr.rel (0) target = $region21
    $region20: #{tpu_custom_call.1} parent=1 // pred_region
      %190 = vsyncadd [#allocation5], 0
      %s192 = sshll.u32 [#allocation4], 4
      %s193 = int_to_ptr.vmem [resolvable:$true] %s192
      %s194 = sshll.u32 %s4, 4
      %s195 = int_to_ptr.hbm [resolvable:$true] %s194
      %197 = dma.vmem_to_hbm [thread:$0]  %s193, 128, %s195, [#allocation5]
    $region21: #{tpu_custom_call.1} parent=1 // pred_fallthru
      _
    // Predicated region
    $region22: #{tpu_custom_call.1} parent=1 // pred_check
      _
    $region23: #{tpu_custom_call.1} parent=1 // pred_check_branch
      %199 = sbr.rel (0) target = $region25
    $region24: #{tpu_custom_call.1} parent=1 // pred_region
      %201 = dma.done [#allocation3], 128
    $region25: #{tpu_custom_call.1} parent=1 // pred_fallthru
      _
    // Predicated region
    $region26: #{tpu_custom_call.1} parent=1 // pred_check
      _
    $region27: #{tpu_custom_call.1} parent=1 // pred_check_branch
      %203 = sbr.rel (0) target = $region29
    $region28: #{tpu_custom_call.1} parent=1 // pred_region
      %205 = dma.done [#allocation5], 128
    $region29: #{tpu_custom_call.1} parent=1 // pred_fallthru
      _
    %206 = vsyncpa [#allocation3], 1
    %207 = vsyncpa [#allocation5], 1

</llo_original>
